<compile_context>
chip_gen: v5e
topology: v5e:2x2
jax: 0.10.0
libtpu: 0.0.40
codegen_flags: <defaults>
</compile_context>

<pallas_src>
import jax
import jax.numpy as jnp
from jax.experimental import pallas as pl
from jax.experimental.pallas import tpu as pltpu


def arithmetic_kernel(x_ref, w_ref, c_ref, o_ref):
    # o = x * w + (w - b), with (w - b) prefolded into c (same 5x5 shape).
    o_ref[...] = x_ref[...] * w_ref[...] + c_ref[...]


def arithmetic_forward(x, w, c):
    return pl.pallas_call(
        arithmetic_kernel,
        out_shape=jax.ShapeDtypeStruct(x.shape, x.dtype),
        in_specs=[
            pl.BlockSpec(memory_space=pltpu.VMEM),
            pl.BlockSpec(memory_space=pltpu.VMEM),
            pl.BlockSpec(memory_space=pltpu.VMEM),
        ],
        out_specs=pl.BlockSpec(memory_space=pltpu.VMEM),
    )(x, w, c)


if __name__ == "__main__":
    # Module parameters (deterministic, matching __init__):
    #   w = ones([5, 5]) * 5, b = ones([5])
    w = jnp.ones((5, 5), dtype=jnp.float32) * 5.0
    b = jnp.ones((5,), dtype=jnp.float32)

    # Parameter-only fold, done once (amortized across every forward call):
    # c = w - b, broadcast of b over rows matches PyTorch's broadcasting.
    c = w - b[None, :]

    # Deterministic example input (get_dummy_input_tensor: randn(5, 5))
    key = jax.random.PRNGKey(0)
    x = jax.random.normal(key, (5, 5), dtype=jnp.float32)

    out = arithmetic_forward(x, w, c)
    out = jax.block_until_ready(out)

    # Reference: exact PyTorch semantics x * w + w - b (b broadcast over rows)
    ref = x * w + w - b[None, :]
    assert jnp.allclose(out, ref, atol=1e-6), "mismatch vs reference"
    print("KERNEL_OK")
</pallas_src>

<mosaic_0001>
module attributes {stable_mosaic.version = 11 : i64} {
  func.func @arithmetic_kernel(%arg0: memref<5x5xf32, #tpu.memory_space<vmem>>, %arg1: memref<5x5xf32, #tpu.memory_space<vmem>>, %arg2: memref<5x5xf32, #tpu.memory_space<vmem>>, %arg3: memref<5x5xf32, #tpu.memory_space<vmem>>) attributes {dimension_semantics = [], scalar_prefetch = 0 : i64, scratch_operands = 0 : i64, tpu.core_type = #tpu.core_type<tc>} {
    %c0 = arith.constant 0 : index
    %c0_0 = arith.constant 0 : index
    %0 = vector.load %arg0[%c0, %c0_0] : memref<5x5xf32, #tpu.memory_space<vmem>>, vector<5x5xf32>
    %c0_1 = arith.constant 0 : index
    %c0_2 = arith.constant 0 : index
    %1 = vector.load %arg1[%c0_1, %c0_2] : memref<5x5xf32, #tpu.memory_space<vmem>>, vector<5x5xf32>
    %2 = arith.mulf %0, %1 : vector<5x5xf32>
    %c0_3 = arith.constant 0 : index
    %c0_4 = arith.constant 0 : index
    %3 = vector.load %arg2[%c0_3, %c0_4] : memref<5x5xf32, #tpu.memory_space<vmem>>, vector<5x5xf32>
    %4 = arith.addf %2, %3 : vector<5x5xf32>
    %c0_5 = arith.constant 0 : index
    %c0_6 = arith.constant 0 : index
    %5 = vector.load %arg3[%c0_5, %c0_6] : memref<5x5xf32, #tpu.memory_space<vmem>>, vector<5x5xf32>
    tpu.vector_store %arg3[%c0_5, %c0_6], %4 {strides = array<i32>} : memref<5x5xf32, #tpu.memory_space<vmem>>, vector<5x5xf32>,
    return
  }
}

</mosaic_0001>

<llo_original>
// kernel: tpu_custom_call.1
$region0: #{tpu_custom_call.1}
  #allocation0 [shape = 'u32[]', space=smem, size = 0x4, offset = 0x4, fixed_abs, tag = 'smem constant byte address 0x4 - core index']
  #allocation1 [shape = 'u32[72,128]{1,0:T(1,128)}', space=vmem, size = 0x9000, scoped, tag = 'internal scratch']
  %s0 = inlined_call_operand.hbm [shape: f32[5,5], index: 0, kind: input, shape index: {}]
  %s1 = inlined_call_operand.hbm [shape: f32[5,5], index: 1, kind: input, shape index: {}]
  %s2 = inlined_call_operand.hbm [shape: f32[5,5], index: 2, kind: input, shape index: {}]
  %s3 = inlined_call_operand.hbm [shape: f32[5,5], index: 3, kind: output, shape index: {}]
  %s4 = sld [smem:[#allocation0]]
  $region34: #{tpu_custom_call.1} parent=0
    _
  %s6 = ssub.s32 1, %s4
  %s7 = scalar_select 0, %s6, %s4
  $region1: #{tpu_custom_call.1} parent=0
    #allocation2 [shape = 'u8[4096]{0}', space=vmem, size = 0x1000, scoped, tag = 'input window, operand 0, single buffered']
    #allocation3 [shape = 's32[1]{0}', space=sflag, size = 0x4, scoped, tag = 'scoped memory for tpu_custom_call.1']
    #allocation4 [shape = 's32[1]{0}', space=sflag, size = 0x4, scoped, tag = 'scoped memory for tpu_custom_call.1']
    #allocation5 [shape = 'u8[4096]{0}', space=vmem, size = 0x1000, scoped, tag = 'input window, operand 1, single buffered']
    #allocation6 [shape = 's32[1]{0}', space=sflag, size = 0x4, scoped, tag = 'scoped memory for tpu_custom_call.1']
    #allocation7 [shape = 'u8[4096]{0}', space=vmem, size = 0x1000, scoped, tag = 'input window, operand 2, single buffered']
    #allocation8 [shape = 'u8[4096]{0}', space=vmem, size = 0x1000, scoped, tag = 'output window, operand 0, single buffered']
    %8 = vsyncpa [#allocation3], 0
    %9 = vsyncpa [#allocation6], 0
    %10 = vsyncpa [#allocation4], 0
    // Predicated region
    $region2: #{tpu_custom_call.1} parent=1 // pred_check
      _
    $region3: #{tpu_custom_call.1} parent=1 // pred_check_branch
      %12 = sbr.rel (0) target = $region5
    $region4: #{tpu_custom_call.1} parent=1 // pred_region
      %14 = vsyncadd [#allocation3], 0
      %s16 = sshll.u32 %s0, 4
      %s17 = int_to_ptr.hbm [resolvable:$true] %s16
      %s18 = sshll.u32 [#allocation2], 4
      %s19 = int_to_ptr.vmem [resolvable:$true] %s18
      %21 = dma.hbm_to_vmem [thread:$0]  %s17, 128, %s19, [#allocation3]
    $region5: #{tpu_custom_call.1} parent=1 // pred_fallthru
      _
    // Predicated region
    $region6: #{tpu_custom_call.1} parent=1 // pred_check
      _
    $region7: #{tpu_custom_call.1} parent=1 // pred_check_branch
      %23 = sbr.rel (0) target = $region9
    $region8: #{tpu_custom_call.1} parent=1 // pred_region
      %25 = vsyncadd [#allocation6], 0
      %s27 = sshll.u32 %s1, 4
      %s28 = int_to_ptr.hbm [resolvable:$true] %s27
      %s29 = sshll.u32 [#allocation5], 4
      %s30 = int_to_ptr.vmem [resolvable:$true] %s29
      %32 = dma.hbm_to_vmem [thread:$0]  %s28, 128, %s30, [#allocation6]
    $region9: #{tpu_custom_call.1} parent=1 // pred_fallthru
      _
    // Predicated region
    $region10: #{tpu_custom_call.1} parent=1 // pred_check
      _
    $region11: #{tpu_custom_call.1} parent=1 // pred_check_branch
      %34 = sbr.rel (0) target = $region13
    $region12: #{tpu_custom_call.1} parent=1 // pred_region
      %36 = vsyncadd [#allocation6], 0
      %s38 = sshll.u32 %s2, 4
      %s39 = int_to_ptr.hbm [resolvable:$true] %s38
      %s40 = sshll.u32 [#allocation7], 4
      %s41 = int_to_ptr.vmem [resolvable:$true] %s40
      %43 = dma.hbm_to_vmem [thread:$0]  %s39, 128, %s41, [#allocation6]
    $region13: #{tpu_custom_call.1} parent=1 // pred_fallthru
      _
    // Predicated region
    $region14: #{tpu_custom_call.1} parent=1 // pred_check
      _
    $region15: #{tpu_custom_call.1} parent=1 // pred_check_branch
      %45 = sbr.rel (0) target = $region17
    $region16: #{tpu_custom_call.1} parent=1 // pred_region
      %47 = dma.done [#allocation3], 128
    $region17: #{tpu_custom_call.1} parent=1 // pred_fallthru
      _
    // Predicated region
    $region18: #{tpu_custom_call.1} parent=1 // pred_check
      _
    $region19: #{tpu_custom_call.1} parent=1 // pred_check_branch
      %49 = sbr.rel (0) target = $region21
    $region20: #{tpu_custom_call.1} parent=1 // pred_region
      %51 = dma.done [#allocation6], 128
    $region21: #{tpu_custom_call.1} parent=1 // pred_fallthru
      _
    // Predicated region
    $region22: #{tpu_custom_call.1} parent=1 // pred_check
      _
    $region23: #{tpu_custom_call.1} parent=1 // pred_check_branch
      %53 = sbr.rel (0) target = $region25
    $region24: #{tpu_custom_call.1} parent=1 // pred_region
      %55 = dma.done [#allocation6], 128
    $region25: #{tpu_custom_call.1} parent=1 // pred_fallthru
      _
    %v56 = vld [vmem:[#allocation2] sm:$0x1f]
    %v57 = vld [vmem:[#allocation5] sm:$0x1f]
    %v58 = vmul.f32 %v56, %v57
    %v59 = vld [vmem:[#allocation7] sm:$0x1f]
    %v60 = vadd.f32 %v58, %v59
    %vm61 = vcmask 36864
    %62 = vst.msk [vmem:[#allocation8] sm:$0x1f] %vm61, %v60
    // Predicated region
    $region26: #{tpu_custom_call.1} parent=1 // pred_check
      _
    $region27: #{tpu_custom_call.1} parent=1 // pred_check_branch
      %64 = sbr.rel (0) target = $region29
    $region28: #{tpu_custom_call.1} parent=1 // pred_region
      %66 = vsyncadd [#allocation4], 0
      %s68 = sshll.u32 [#allocation8], 4
      %s69 = int_to_ptr.vmem [resolvable:$true] %s68
      %s70 = sshll.u32 %s3, 4
      %s71 = int_to_ptr.hbm [resolvable:$true] %s70
      %73 = dma.vmem_to_hbm [thread:$0]  %s69, 128, %s71, [#allocation4]
    $region29: #{tpu_custom_call.1} parent=1 // pred_fallthru
      _
    // Predicated region
    $region30: #{tpu_custom_call.1} parent=1 // pred_check
      _
    $region31: #{tpu_custom_call.1} parent=1 // pred_check_branch
      %75 = sbr.rel (0) target = $region33
    $region32: #{tpu_custom_call.1} parent=1 // pred_region
      %77 = dma.done [#allocation4], 128
    $region33: #{tpu_custom_call.1} parent=1 // pred_fallthru
      _
    %78 = vsyncpa [#allocation3], 1
    %79 = vsyncpa [#allocation6], 1
    %80 = vsyncpa [#allocation4], 1

</llo_original>
